<compile_context>
chip_gen: v6e
topology: v6e:2x2x1
jax: 0.10.0
libtpu: 0.0.40
codegen_flags: <defaults>
</compile_context>

<pallas_src>
import jax
import jax.numpy as jnp
from jax.experimental import pallas as pl
from jax.experimental.pallas import tpu as pltpu


def _combine_kernel(x_ref, o_ref):
    x = x_ref[...]                                               # (Bblk, N, D)

    # L2 norm over the feature dim (lane reduce).
    norms = jnp.sqrt(jnp.sum(x * x, axis=-1, keepdims=True))     # (Bblk, N, 1)

    # Softmax over the capsule dim (dim=1): cheap sublane reduces over N.
    m = jnp.max(norms, axis=1, keepdims=True)                    # (Bblk, 1, 1)
    e = jnp.exp(norms - m)                                       # (Bblk, N, 1)
    denom = jnp.sum(e, axis=1, keepdims=True)                    # (Bblk, 1, 1)
    ax = e / denom                                               # exact divide

    # Weighted sum over capsules -> sublane-dense (Bblk, D) output block.
    o_ref[...] = jnp.sum(x * ax, axis=1).astype(o_ref.dtype)     # (Bblk, D)


def _pick_block_b(B, N, D, itemsize, tile_budget_bytes=4 * 1024 * 1024):
    """Choose (block_b, padded_B).

    Target: input tile <= ~4 MiB (so 2x double-buffered input + output stays
    well under v5e's 16 MiB scoped-VMEM default and far under v6e/v7x), rows
    a multiple of 8 (sublane-dense output blocks), grid as long as possible.
    """
    bytes_per_row = max(1, N * D * itemsize)
    max_rows = max(8, (tile_budget_bytes // bytes_per_row) // 8 * 8)

    if B <= max_rows:
        # Small batch: one step with the full batch (block == full array dims,
        # so no (8,128) divisibility requirement on the row count).
        return B, B

    # Largest multiple-of-8 divisor of B that fits the budget.
    d = max_rows
    while d >= 8:
        if B % d == 0:
            return d, B
        d -= 8

    # No usable divisor: pad the batch and slice the result in the wrapper.
    block_b = min(max_rows, 512)
    padded_B = ((B + block_b - 1) // block_b) * block_b
    return block_b, padded_B


def combine(x, *, block_b=None):
    """x: (B, N, D) float -> (B, 1, D), matching Combine.forward."""
    B, N, D = x.shape
    itemsize = jnp.dtype(x.dtype).itemsize

    if block_b is None:
        block_b, padded_B = _pick_block_b(B, N, D, itemsize)
    else:
        padded_B = ((B + block_b - 1) // block_b) * block_b

    grid = padded_B // block_b
    # Output block is (block_b, D): when tiled (grid > 1) the sublane dim must
    # be a multiple of 8; a single full-batch block is always legal.
    assert grid == 1 or block_b % 8 == 0, "block_b must be a multiple of 8"

    if padded_B != B:
        x = jnp.pad(x, ((0, padded_B - B), (0, 0), (0, 0)))

    out = pl.pallas_call(
        _combine_kernel,
        out_shape=jax.ShapeDtypeStruct((padded_B, D), x.dtype),
        grid=(grid,),
        in_specs=[pl.BlockSpec((block_b, N, D), lambda b: (b, 0, 0))],
        out_specs=pl.BlockSpec((block_b, D), lambda b: (b, 0)),
        compiler_params=pltpu.CompilerParams(
            dimension_semantics=("parallel",)),
    )(x)

    return out[:B].reshape(B, 1, D)


def combine_ref(x):
    """Pure-JAX reference mirroring the PyTorch forward."""
    a = jnp.linalg.norm(x, ord=2, axis=2, keepdims=True)         # (B, N, 1)
    ax = jax.nn.softmax(a, axis=1)                               # (B, N, 1)
    return jnp.sum(x * ax, axis=1, keepdims=True)                # (B, 1, D)


if __name__ == "__main__":
    key = jax.random.PRNGKey(0)

    # Small shape consistent with the module: (batch, num_capsules, capsule_dim).
    B, N, D = 2, 8, 128
    x = jax.random.normal(key, (B, N, D), dtype=jnp.float32)

    out = jax.block_until_ready(combine(x))
    ref = combine_ref(x)
    assert out.shape == (B, 1, D)
    assert jnp.allclose(out, ref, atol=1e-5, rtol=1e-5), \
        f"max err {jnp.max(jnp.abs(out - ref))}"

    # Exercise the multi-step grid / sublane-dense output path (grid=4).
    B2 = 32
    x2 = jax.random.normal(jax.random.PRNGKey(1), (B2, N, D), dtype=jnp.float32)
    out2 = jax.block_until_ready(combine(x2, block_b=8))
    ref2 = combine_ref(x2)
    assert out2.shape == (B2, 1, D)
    assert jnp.allclose(out2, ref2, atol=1e-5, rtol=1e-5), \
        f"max err {jnp.max(jnp.abs(out2 - ref2))}"

    print("KERNEL_OK")
</pallas_src>

<mosaic_0001>
module attributes {stable_mosaic.version = 11 : i64} {
  func.func @_combine_kernel(%arg0: i32, %arg1: memref<2x8x128xf32, #tpu.memory_space<vmem>>, %arg2: memref<2x128xf32, #tpu.memory_space<vmem>>) attributes {dimension_semantics = [#tpu.dimension_semantics<parallel>], iteration_bounds = array<i64: 1>, scalar_prefetch = 0 : i64, scratch_operands = 0 : i64, tpu.core_type = #tpu.core_type<tc>, window_params = [{transform_indices = @transform_0, window_bounds = array<i64: 2, 8, 128>}, {transform_indices = @transform_1, window_bounds = array<i64: 2, 128>}]} {
    %c0 = arith.constant 0 : index
    %c0_0 = arith.constant 0 : index
    %c0_1 = arith.constant 0 : index
    %0 = vector.load %arg1[%c0, %c0_0, %c0_1] : memref<2x8x128xf32, #tpu.memory_space<vmem>>, vector<2x8x128xf32>
    %1 = arith.mulf %0, %0 : vector<2x8x128xf32>
    %cst = arith.constant dense<0.000000e+00> : vector<2x8xf32>
    %2 = vector.multi_reduction <add>, %1, %cst [2] : vector<2x8x128xf32> to vector<2x8xf32>
    %3 = vector.shape_cast %2 : vector<2x8xf32> to vector<2x8x1xf32>
    %4 = math.sqrt %3 : vector<2x8x1xf32>
    %cst_2 = arith.constant dense<0xFF800000> : vector<2x1xf32>
    %5 = vector.multi_reduction <maximumf>, %4, %cst_2 [1] : vector<2x8x1xf32> to vector<2x1xf32>
    %6 = vector.shape_cast %5 : vector<2x1xf32> to vector<2x1x1xf32>
    %7 = vector.broadcast %6 : vector<2x1x1xf32> to vector<2x8x1xf32>
    %8 = arith.subf %4, %7 : vector<2x8x1xf32>
    %9 = math.exp %8 : vector<2x8x1xf32>
    %cst_3 = arith.constant dense<0.000000e+00> : vector<2x1xf32>
    %10 = vector.multi_reduction <add>, %9, %cst_3 [1] : vector<2x8x1xf32> to vector<2x1xf32>
    %11 = vector.shape_cast %10 : vector<2x1xf32> to vector<2x1x1xf32>
    %12 = vector.broadcast %11 : vector<2x1x1xf32> to vector<2x8x1xf32>
    %13 = arith.divf %9, %12 : vector<2x8x1xf32>
    %14 = vector.broadcast %13 : vector<2x8x1xf32> to vector<2x8x128xf32>
    %15 = arith.mulf %0, %14 : vector<2x8x128xf32>
    %cst_4 = arith.constant dense<0.000000e+00> : vector<2x128xf32>
    %16 = vector.multi_reduction <add>, %15, %cst_4 [1] : vector<2x8x128xf32> to vector<2x128xf32>
    %c0_5 = arith.constant 0 : index
    %c0_6 = arith.constant 0 : index
    %17 = vector.load %arg2[%c0_5, %c0_6] : memref<2x128xf32, #tpu.memory_space<vmem>>, vector<2x128xf32>
    tpu.vector_store %arg2[%c0_5, %c0_6], %16 {strides = array<i32>} : memref<2x128xf32, #tpu.memory_space<vmem>>, vector<2x128xf32>,
    return
  }
  func.func @transform_0(%arg0: i32) -> (i32, i32, i32) {
    %c0_i32 = arith.constant 0 : i32
    %c0_i32_0 = arith.constant 0 : i32
    %c0_i32_1 = arith.constant 0 : i32
    return %arg0, %c0_i32, %c0_i32_0 : i32, i32, i32
  }
  func.func @transform_1(%arg0: i32) -> (i32, i32) {
    %c0_i32 = arith.constant 0 : i32
    %c0_i32_0 = arith.constant 0 : i32
    return %arg0, %c0_i32 : i32, i32
  }
}

</mosaic_0001>

<llo_original>
// kernel: tpu_custom_call.1
$region0: #{tpu_custom_call.1}
  #allocation0 [shape = 'u32[]', space=smem, size = 0x4, offset = 0x4, fixed_abs, tag = 'smem constant byte address 0x4 - core index']
  #allocation1 [shape = 'u32[144,128]{1,0:T(1,128)}', space=vmem, size = 0x12000, scoped, tag = 'internal scratch']
  %s0 = inlined_call_operand.hbm [shape: f32[2,8,128], index: 0, kind: input, shape index: {}]
  %s1 = inlined_call_operand.hbm [shape: f32[2,128], index: 1, kind: output, shape index: {}]
  %s2 = sld [smem:[#allocation0]]
  $region18: #{tpu_custom_call.1} parent=0
    _
  %s4 = ssub.s32 1, %s2
  %s5 = scalar_select 0, %s4, %s2
  $region1: #{tpu_custom_call.1} parent=0
    #allocation2 [shape = 'u8[8192]{0}', space=vmem, size = 0x2000, scoped, tag = 'input window, operand 0, single buffered']
    #allocation3 [shape = 's32[1]{0}', space=sflag, size = 0x4, scoped, tag = 'scoped memory for tpu_custom_call.1']
    #allocation4 [shape = 's32[1]{0}', space=sflag, size = 0x4, scoped, tag = 'scoped memory for tpu_custom_call.1']
    #allocation5 [shape = 'u8[1024]{0}', space=vmem, size = 0x400, scoped, tag = 'output window, operand 0, single buffered']
    %6 = vsyncpa [#allocation3], 0
    %7 = vsyncpa [#allocation4], 0
    // Predicated region
    $region2: #{tpu_custom_call.1} parent=1 // pred_check
      _
    $region3: #{tpu_custom_call.1} parent=1 // pred_check_branch
      %9 = sbr.rel (0) target = $region5
    $region4: #{tpu_custom_call.1} parent=1 // pred_region
      %s11 = ssub.s32 256, 256
      %12 = vsyncadd [#allocation3], %s11
      %s13 = sshll.u32 [#allocation2], 4
      %s14 = int_to_ptr.vmem [resolvable:$true] %s13
      %19 = dma.hbm_to_vmem [thread:$0]  %s0, 256, %s14, [#allocation3], 128, 128, 8
    $region5: #{tpu_custom_call.1} parent=1 // pred_fallthru
      _
    // Predicated region
    $region6: #{tpu_custom_call.1} parent=1 // pred_check
      _
    $region7: #{tpu_custom_call.1} parent=1 // pred_check_branch
      %21 = sbr.rel (0) target = $region9
    $region8: #{tpu_custom_call.1} parent=1 // pred_region
      %22 = dma.done [#allocation3], 256
    $region9: #{tpu_custom_call.1} parent=1 // pred_fallthru
      _
    %v23 = vld [vmem:[#allocation2] sm:$0xff]
    %v24 = vld [vmem:[#allocation2 + $0x8] sm:$0xff]
    %v25 = vmul.f32 %v23, %v23
    %v26 = vmul.f32 %v24, %v24
    %27 = vadd.xlane.f32.xlu0 %v25
    %v28 = vpop.xlane.xlu0 %27
    %29 = vadd.xlane.f32.xlu0 %v26
    %v30 = vpop.xlane.xlu0 %29
    %v31 = vrsqrt.pop %v28
    %v32 = vmul.f32 %v28, %v31
    %vm33 = vcmp.eq.f32.partialorder %v28, inf
    %v34 = vsel %vm33, %v28, %v32
    %vm35 = vcmp.eq.f32.partialorder %v28, 0.0
    %v36 = vand.u32 %v28, 2147483648
    %v37 = vsel %vm35, %v36, %v34
    %v38 = vrsqrt.pop %v30
    %v39 = vmul.f32 %v30, %v38
    %vm40 = vcmp.eq.f32.partialorder %v30, inf
    %v41 = vsel %vm40, %v30, %v39
    %vm42 = vcmp.eq.f32.partialorder %v30, 0.0
    %v43 = vand.u32 %v30, 2147483648
    %v44 = vsel %vm42, %v43, %v41
    %v45 = vrot.slane %v37, 4
    %v46 = vmax.f32 %v37, %v45
    %v47 = vrot.slane %v46, 2
    %v48 = vmax.f32 %v46, %v47
    %v49 = vrot.slane %v48, 1
    %v50 = vmax.f32 %v48, %v49
    %v51 = vrot.slane %v44, 4
    %v52 = vmax.f32 %v44, %v51
    %v53 = vrot.slane %v52, 2
    %v54 = vmax.f32 %v52, %v53
    %v55 = vrot.slane %v54, 1
    %v56 = vmax.f32 %v54, %v55
    %v57 = vsub.f32 %v37, %v50
    %v58 = vsub.f32 %v44, %v56
    %v59 = vmul.f32 %v57, 1.442695
    %v60 = vpow.pop %v59
    %v61 = vmul.f32 %v58, 1.442695
    %v62 = vpow.pop %v61
    %v63 = vrot.slane %v60, 4
    %v64 = vadd.f32 %v60, %v63
    %v65 = vrot.slane %v64, 2
    %v66 = vadd.f32 %v64, %v65
    %v67 = vrot.slane %v66, 1
    %v68 = vadd.f32 %v66, %v67
    %v69 = vrot.slane %v62, 4
    %v70 = vadd.f32 %v62, %v69
    %v71 = vrot.slane %v70, 2
    %v72 = vadd.f32 %v70, %v71
    %v73 = vrot.slane %v72, 1
    %v74 = vadd.f32 %v72, %v73
    %v75 = vrcp.pop %v68
    %v76 = vmul.f32 %v60, %v75
    %v77 = vrcp.pop %v74
    %v78 = vmul.f32 %v62, %v77
    %v79 = vmul.f32 %v23, %v76
    %v80 = vmul.f32 %v24, %v78
    %v81 = vrot.slane %v79, 4
    %v82 = vadd.f32 %v79, %v81
    %v83 = vrot.slane %v82, 2
    %v84 = vadd.f32 %v82, %v83
    %v85 = vrot.slane %v84, 1
    %v86 = vadd.f32 %v84, %v85
    %v87 = vrot.slane %v80, 4
    %v88 = vadd.f32 %v80, %v87
    %v89 = vrot.slane %v88, 2
    %v90 = vadd.f32 %v88, %v89
    %v91 = vrot.slane %v90, 1
    %v92 = vadd.f32 %v90, %v91
    %vm95 = vcmask 1041409
    %v96 = vsel %vm95, %v92, %v86
    %98 = vst [vmem:[#allocation5] sm:$0x3] %v96
    // Predicated region
    $region10: #{tpu_custom_call.1} parent=1 // pred_check
      _
    $region11: #{tpu_custom_call.1} parent=1 // pred_check_branch
      %100 = sbr.rel (0) target = $region13
    $region12: #{tpu_custom_call.1} parent=1 // pred_region
      %s102 = ssub.s32 32, 32
      %103 = vsyncadd [#allocation4], %s102
      %s105 = sshll.u32 [#allocation5], 4
      %s106 = int_to_ptr.vmem [resolvable:$true] %s105
      %108 = dma.vmem_to_hbm [thread:$0]  %s106, 32, %s1, [#allocation4]
    $region13: #{tpu_custom_call.1} parent=1 // pred_fallthru
      _
    // Predicated region
    $region14: #{tpu_custom_call.1} parent=1 // pred_check
      _
    $region15: #{tpu_custom_call.1} parent=1 // pred_check_branch
      %110 = sbr.rel (0) target = $region17
    $region16: #{tpu_custom_call.1} parent=1 // pred_region
      %111 = dma.done [#allocation4], 32
    $region17: #{tpu_custom_call.1} parent=1 // pred_fallthru
      _
    %112 = vsyncpa [#allocation3], 1
    %113 = vsyncpa [#allocation4], 1

</llo_original>
